<compile_context>
chip_gen: v7x
topology: tpu7x:2x2x1
jax: 0.10.0
libtpu: 0.0.40
codegen_flags: <defaults>
</compile_context>

<pallas_src>
import math

import jax
import jax.numpy as jnp
from jax.experimental import pallas as pl
from jax.experimental.pallas import tpu as pltpu


MAX_BATCH_TILE = 2048  # lanes (batch elements) per grid step


def _round_up(v, m):
    return ((v + m - 1) // m) * m


def mlp_kernel(x_ref, w_ref, b2_ref, o_ref):
    """Batch-on-lanes forward for Net(n_feature=1, n_hidden, n_output=1).

    x_ref : (1, TB)      f32 VMEM   batch on lanes (lane-dense row)
    w_ref : (H_PAD, 3)   f32 VMEM   columns = [w1, b1, w2], hidden on sublanes
    b2_ref: (1,)         f32 SMEM   scalar output bias
    o_ref : (1, TB)      f32 VMEM   lane-dense output row
    """
    x = x_ref[...]                      # (1, TB)
    w1 = w_ref[:, 0:1]                  # (H_PAD, 1)
    b1 = w_ref[:, 1:2]                  # (H_PAD, 1)
    w2 = w_ref[:, 2:3]                  # (H_PAD, 1)

    # hidden = relu(w1 ⊗ x + b1): pure VPU broadcast multiply/add/max.
    h = jnp.maximum(w1 * x + b1, 0.0)   # (H_PAD, TB); padded sublanes stay 0

    # out = sum over hidden (sublane axis): VPU multiply + XLU reduction.
    y = jnp.sum(h * w2, axis=0, keepdims=True)       # (1, TB)

    # Scalar output bias straight from SMEM.
    o_ref[...] = (y + b2_ref[0]).astype(o_ref.dtype)


def pack_params(w1, b1, w2, b2):
    """Done once at init (hoisted off the hot path).

    w1: (1, H), b1: (1, H), w2: (H, 1), b2: (1, 1)
    Returns:
      packed: (H_PAD, 3) f32, columns [w1, b1, w2], hidden zero-padded to a
              sublane multiple (8).
      b2_s  : (1,) f32 scalar for SMEM.
    """
    n_hidden = w1.shape[1]
    assert w1.shape == (1, n_hidden) and b1.shape == (1, n_hidden)
    assert w2.shape == (n_hidden, 1) and b2.size == 1
    h_pad = _round_up(n_hidden, 8)
    cols = jnp.stack(
        [w1.reshape(n_hidden), b1.reshape(n_hidden), w2.reshape(n_hidden)],
        axis=1,
    ).astype(jnp.float32)                                  # (H, 3)
    packed = jnp.pad(cols, ((0, h_pad - n_hidden), (0, 0)))  # (H_PAD, 3)
    return packed, b2.reshape(1).astype(jnp.float32)


def _forward_impl(x, packed, b2):
    """x: (N, 1) f32. packed: (H_PAD, 3). b2: (1,). Returns (N, 1) f32."""
    n, n_feature = x.shape
    assert n_feature == 1, "kernel is specialized for Net(n_feature=1, ..., n_output=1)"
    h_pad = packed.shape[0]

    # Batch tiling along lanes: one big tile for small batches, 2048-lane
    # tiles (multi-step, "parallel" -> shardable across v7x's 2 TCs) beyond.
    tile = min(_round_up(n, 128), MAX_BATCH_TILE)
    b_pad = _round_up(n, tile)
    grid = (b_pad // tile,)

    # Batch on lanes: (N, 1) -> zero-padded lane-dense (1, b_pad) row.
    x_row = jnp.pad(x.astype(jnp.float32).reshape(1, n), ((0, 0), (0, b_pad - n)))

    out_row = pl.pallas_call(
        mlp_kernel,
        out_shape=jax.ShapeDtypeStruct((1, b_pad), jnp.float32),
        grid=grid,
        in_specs=[
            # x: tiled over the batch (lane) axis, VMEM.
            pl.BlockSpec((1, tile), lambda i: (0, i)),
            # packed [w1|b1|w2]: one resident full block across the batch axis.
            pl.BlockSpec((h_pad, 3), lambda i: (0, 0)),
            # b2: single scalar in SMEM (1-D -> 4 bytes after padding).
            pl.BlockSpec(memory_space=pltpu.MemorySpace.SMEM),
        ],
        out_specs=pl.BlockSpec((1, tile), lambda i: (0, i)),
        compiler_params=pltpu.CompilerParams(
            dimension_semantics=("parallel",)),
    )(x_row, packed, b2)

    # Padded batch lanes hold relu(b1)·w2 + b2 garbage; slice the real rows.
    return out_row[0, :n].reshape(n, 1)


# Keep pad + kernel + slice under one jit so XLA fuses the plumbing.
net_forward = jax.jit(_forward_impl)


def init_linear_params(key, fan_in, fan_out):
    """Deterministic init mimicking torch.nn.Linear default
    (U[-1/sqrt(fan_in), 1/sqrt(fan_in)]). Returns W as (fan_in, fan_out)
    (already transposed for x @ W) and b as (1, fan_out)."""
    kw, kb = jax.random.split(key)
    bound = 1.0 / math.sqrt(fan_in)
    w = jax.random.uniform(kw, (fan_in, fan_out), jnp.float32, -bound, bound)
    b = jax.random.uniform(kb, (1, fan_out), jnp.float32, -bound, bound)
    return w, b


if __name__ == "__main__":
    n_feature, n_hidden, n_output = 1, 10, 1
    batch = 100

    # Same input as the original script:
    # torch.unsqueeze(torch.linspace(-1, 1, 100), dim=1)
    x = jnp.linspace(-1.0, 1.0, batch, dtype=jnp.float32).reshape(batch, n_feature)

    key = jax.random.PRNGKey(0)
    k1, k2 = jax.random.split(key)
    w1, b1 = init_linear_params(k1, n_feature, n_hidden)
    w2, b2 = init_linear_params(k2, n_hidden, n_output)

    # Pad/pack weights once (off the hot path).
    packed, b2_s = pack_params(w1, b1, w2, b2)

    out = net_forward(x, packed, b2_s)
    out = jax.block_until_ready(out)

    # Correctness check against plain-JAX reference of the same forward pass.
    ref = jnp.maximum(x @ w1 + b1, 0.0) @ w2 + b2
    assert out.shape == (batch, n_output)
    assert jnp.allclose(out, ref, atol=1e-5, rtol=1e-5)

    print("KERNEL_OK")
</pallas_src>

<mosaic_0001>
module attributes {stable_mosaic.version = 11 : i64} {
  func.func @mlp_kernel(%arg0: i32, %arg1: memref<1x128xf32, #tpu.memory_space<vmem>>, %arg2: memref<16x3xf32, #tpu.memory_space<vmem>>, %arg3: memref<1xf32, #tpu.memory_space<smem>>, %arg4: memref<1x128xf32, #tpu.memory_space<vmem>>) attributes {dimension_semantics = [#tpu.dimension_semantics<parallel>], iteration_bounds = array<i64: 1>, scalar_prefetch = 0 : i64, scratch_operands = 0 : i64, tpu.core_type = #tpu.core_type<tc>, window_params = [{transform_indices = @transform_0, window_bounds = array<i64: 1, 128>}, {pipeline_mode = #tpu.pipeline_mode<synchronous>, transform_indices = @transform_1, window_bounds = array<i64: 16, 3>}, {transform_indices = @transform_2, window_bounds = array<i64: 1>}, {transform_indices = @transform_3, window_bounds = array<i64: 1, 128>}]} {
    %c0 = arith.constant 0 : index
    %c0_0 = arith.constant 0 : index
    %0 = vector.load %arg1[%c0, %c0_0] : memref<1x128xf32, #tpu.memory_space<vmem>>, vector<1x128xf32>
    %c0_1 = arith.constant 0 : index
    %c0_2 = arith.constant 0 : index
    %1 = vector.load %arg2[%c0_1, %c0_2] : memref<16x3xf32, #tpu.memory_space<vmem>>, vector<16x1xf32>
    %c0_3 = arith.constant 0 : index
    %c1 = arith.constant 1 : index
    %2 = vector.load %arg2[%c0_3, %c1] : memref<16x3xf32, #tpu.memory_space<vmem>>, vector<16x1xf32>
    %c0_4 = arith.constant 0 : index
    %c2 = arith.constant 2 : index
    %3 = vector.load %arg2[%c0_4, %c2] : memref<16x3xf32, #tpu.memory_space<vmem>>, vector<16x1xf32>
    %4 = vector.broadcast %1 : vector<16x1xf32> to vector<16x128xf32>
    %5 = vector.broadcast %0 : vector<1x128xf32> to vector<16x128xf32>
    %6 = arith.mulf %4, %5 : vector<16x128xf32>
    %7 = vector.broadcast %2 : vector<16x1xf32> to vector<16x128xf32>
    %8 = arith.addf %6, %7 : vector<16x128xf32>
    %cst = arith.constant 0.000000e+00 : f32
    %9 = vector.broadcast %cst : f32 to vector<16x128xf32>
    %10 = arith.maximumf %8, %9 : vector<16x128xf32>
    %11 = vector.broadcast %3 : vector<16x1xf32> to vector<16x128xf32>
    %12 = arith.mulf %10, %11 : vector<16x128xf32>
    %cst_5 = arith.constant dense<0.000000e+00> : vector<128xf32>
    %13 = vector.multi_reduction <add>, %12, %cst_5 [0] : vector<16x128xf32> to vector<128xf32>
    %14 = vector.shape_cast %13 : vector<128xf32> to vector<1x128xf32>
    %c0_6 = arith.constant 0 : index
    %15 = memref.load %arg3[%c0_6] : memref<1xf32, #tpu.memory_space<smem>>
    %16 = vector.broadcast %15 : f32 to vector<1x128xf32>
    %17 = arith.addf %14, %16 : vector<1x128xf32>
    %c0_7 = arith.constant 0 : index
    %c0_8 = arith.constant 0 : index
    %18 = vector.load %arg4[%c0_7, %c0_8] : memref<1x128xf32, #tpu.memory_space<vmem>>, vector<1x128xf32>
    tpu.vector_store %arg4[%c0_7, %c0_8], %17 {strides = array<i32>} : memref<1x128xf32, #tpu.memory_space<vmem>>, vector<1x128xf32>,
    return
  }
  func.func @transform_0(%arg0: i32) -> (i32, i32) {
    %c0_i32 = arith.constant 0 : i32
    %c0_i32_0 = arith.constant 0 : i32
    return %c0_i32, %arg0 : i32, i32
  }
  func.func @transform_1(%arg0: i32) -> (i32, i32) {
    %c0_i32 = arith.constant 0 : i32
    %c0_i32_0 = arith.constant 0 : i32
    %c0_i32_1 = arith.constant 0 : i32
    return %c0_i32, %c0_i32_0 : i32, i32
  }
  func.func @transform_2(%arg0: i32) -> i32 {
    %c0_i32 = arith.constant 0 : i32
    %c0_i32_0 = arith.constant 0 : i32
    return %c0_i32 : i32
  }
  func.func @transform_3(%arg0: i32) -> (i32, i32) {
    %c0_i32 = arith.constant 0 : i32
    %c0_i32_0 = arith.constant 0 : i32
    return %c0_i32, %arg0 : i32, i32
  }
}

</mosaic_0001>

<llo_original>
// kernel: _forward_impl.1
$region0: #{_forward_impl.1}
  #allocation0 [shape = 'u32[]', space=smem, size = 0x4, offset = 0x4, fixed_abs, tag = 'smem constant byte address 0x4 - core index']
  #allocation1 [shape = 'u32[144,128]{1,0:T(1,128)}', space=vmem, size = 0x12000, scoped, tag = 'internal scratch']
  #allocation2 [shape = 'f32[1]{0:T(128)S(6)}', space=smem, size = 0x200, scoped, tag = 'scoped memory for _forward_impl.1']
  %s0 = inlined_call_operand.vmem [shape: f32[1,128], index: 0, kind: input, shape index: {}]
  %s1 = inlined_call_operand.vmem [shape: f32[16,3], index: 1, kind: input, shape index: {}]
  %s2 = inlined_call_operand.<no memory space> [shape: f32[1], index: 2, kind: input, shape index: {}]
  %s3 = inlined_call_operand.vmem [shape: f32[1,128], index: 3, kind: output, shape index: {}]
  %s4 = sld [smem:[#allocation0]]
  $region22: #{_forward_impl.1} parent=0
    _
  %s6 = ssub.s32 1, %s4
  %s7 = scalar_select 0, %s6, %s4
  %8 = sst [smem:[#allocation2]] %s2
  // Predicated region
  $region2: #{_forward_impl.1} parent=0 // pred_check
    _
  $region3: #{_forward_impl.1} parent=0 // pred_check_branch
    %10 = sbr.rel (0) target = $region5
  $region4: #{_forward_impl.1} parent=0 // pred_region
    _
  $region5: #{_forward_impl.1} parent=0 // pred_fallthru
    _
  // Predicated region
  $region6: #{_forward_impl.1} parent=0 // pred_check
    _
  $region7: #{_forward_impl.1} parent=0 // pred_check_branch
    %12 = sbr.rel (0) target = $region9
  $region8: #{_forward_impl.1} parent=0 // pred_region
    _
  $region9: #{_forward_impl.1} parent=0 // pred_fallthru
    _
  // Predicated region
  $region10: #{_forward_impl.1} parent=0 // pred_check
    _
  $region11: #{_forward_impl.1} parent=0 // pred_check_branch
    %14 = sbr.rel (0) target = $region13
  $region12: #{_forward_impl.1} parent=0 // pred_region
    _
  $region13: #{_forward_impl.1} parent=0 // pred_fallthru
    _
  %v15 = vld [vmem:[%s0] sm:$0x1]
  %v16 = vld [vmem:[%s1] sm:$0xff]
  %v17 = vld [vmem:[%s1 + $0x8] sm:$0xff]
  %19 = vset.pattern.permute.xlu0 0
  %20 = vperm.xlu0 %19, %v16
  %v21 = vpop.permute.xlu0 %20
  %24 = vset.pattern.permute.xlu0 0
  %25 = vperm.xlu0 %24, %v17
  %v26 = vpop.permute.xlu0 %25
  %v29 = vlaneseq
  %v30 = vshrl.u32 %v29, 7
  %v31 = vsub.s32 0, %v30
  %v32 = vrot.slane %v15, %v31
  %v34 = vmul.f32 %v21, %v32
  %v35 = vmul.f32 %v26, %v32
  %36 = vset.pattern.permute.xlu0 1
  %37 = vperm.xlu0 %36, %v16
  %v38 = vpop.permute.xlu0 %37
  %40 = vset.pattern.permute.xlu0 1
  %41 = vperm.xlu0 %40, %v17
  %v42 = vpop.permute.xlu0 %41
  %v44 = vadd.f32 %v34, %v38
  %v45 = vadd.f32 %v35, %v42
  %v46 = vmax.f32 %v44, 0.0
  %v47 = vmax.f32 %v45, 0.0
  %48 = vset.pattern.permute.xlu0 2
  %49 = vperm.xlu0 %48, %v16
  %v50 = vpop.permute.xlu0 %49
  %52 = vset.pattern.permute.xlu0 2
  %53 = vperm.xlu0 %52, %v17
  %v54 = vpop.permute.xlu0 %53
  %v56 = vmul.f32 %v46, %v50
  %v57 = vmul.f32 %v47, %v54
  %v58 = vadd.f32 %v56, %v57
  %v59 = vrot.slane %v58, 4
  %v60 = vadd.f32 %v58, %v59
  %v61 = vrot.slane %v60, 2
  %v62 = vadd.f32 %v60, %v61
  %v63 = vrot.slane %v62, 1
  %v64 = vadd.f32 %v62, %v63
  %s65 = sld [smem:[#allocation2]]
  %v66 = vstv %s65
  %v67 = vadd.f32 %v64, %v66
  %68 = vst [vmem:[%s3] sm:$0x1] %v67
  // Predicated region
  $region14: #{_forward_impl.1} parent=0 // pred_check
    _
  $region15: #{_forward_impl.1} parent=0 // pred_check_branch
    %70 = sbr.rel (0) target = $region17
  $region16: #{_forward_impl.1} parent=0 // pred_region
    _
  $region17: #{_forward_impl.1} parent=0 // pred_fallthru
    _
  // Predicated region
  $region18: #{_forward_impl.1} parent=0 // pred_check
    _
  $region19: #{_forward_impl.1} parent=0 // pred_check_branch
    %72 = sbr.rel (0) target = $region21
  $region20: #{_forward_impl.1} parent=0 // pred_region
    _
  $region21: #{_forward_impl.1} parent=0 // pred_fallthru
    _

</llo_original>
